<compile_context>
chip_gen: v7x
topology: tpu7x:2x2x1
jax: 0.10.0
libtpu: 0.0.40
codegen_flags: <defaults>
</compile_context>

<pallas_src>
import jax
import jax.numpy as jnp
import numpy as np
from jax.experimental import pallas as pl
from jax.experimental.pallas import tpu as pltpu


# ---------------------------------------------------------------------------
# Shared in-kernel helper: sigmoid(Conv1d_k(mean)) from per-channel sums.
# ---------------------------------------------------------------------------
def _conv_gate(w_ref, sums_col, ypad_ref, C, k_size, pad, inv_s):
    """Compute the (C, 1) f32 gate from per-channel spatial sums.

    w_ref:    (k,) f32 SMEM ref with the Conv1d taps.
    sums_col: (C, 1) f32 per-channel sums over the pooled spatial axis.
    ypad_ref: (C + 2*pad, 1) f32 VMEM scratch; the pad rows stay zero and realise
              the conv's zero-padded edges, so each tap is a sublane-shifted window.
    """
    ypad_ref[...] = jnp.zeros_like(ypad_ref)
    ypad_ref[pl.ds(pad, C), :] = sums_col
    yc = jnp.zeros((C, 1), jnp.float32)
    for m in range(k_size):                       # k is tiny & static -> unrolled
        yc = yc + w_ref[m] * ypad_ref[pl.ds(m, C), :]
    # The conv is linear, so scaling by 1/S after the conv == conv of the means.
    return jax.nn.sigmoid(yc * inv_s)


# ---------------------------------------------------------------------------
# One-pass fused kernel (slab fits VMEM): read x once, write x*gate once.
# ---------------------------------------------------------------------------
def _eca_one_pass(x_flat, conv_w, k_size, pad, vmem_limit):
    B, C, S = x_flat.shape
    inv_s = 1.0 / float(S)
    itemsize = jnp.dtype(x_flat.dtype).itemsize

    def kernel(w_ref, x_ref, o_ref, ypad_ref):
        x = x_ref[...]                                                   # (C, S) native dtype
        sums = jnp.sum(x, axis=-1, keepdims=True, dtype=jnp.float32)     # f32 accumulation
        gate = _conv_gate(w_ref, sums, ypad_ref, C, k_size, pad, inv_s)  # (C, 1) f32
        o_ref[...] = x * gate.astype(o_ref.dtype)                        # native-dtype multiply

    cost = pl.CostEstimate(
        flops=int(2 * B * C * S + 2 * B * C * k_size),
        transcendentals=int(B * C),
        bytes_accessed=int(2 * B * C * S * itemsize),
    )
    return pl.pallas_call(
        kernel,
        out_shape=jax.ShapeDtypeStruct((B, C, S), x_flat.dtype),
        grid_spec=pltpu.PrefetchScalarGridSpec(
            num_scalar_prefetch=0,
            grid=(B,),
            in_specs=[
                pl.BlockSpec(memory_space=pltpu.MemorySpace.SMEM),        # conv taps (k,)
                pl.BlockSpec((None, C, S), lambda b: (b, 0, 0)),
            ],
            out_specs=pl.BlockSpec((None, C, S), lambda b: (b, 0, 0)),
            scratch_shapes=[pltpu.VMEM((C + 2 * pad, 1), jnp.float32)],
        ),
        compiler_params=pltpu.CompilerParams(
            dimension_semantics=("parallel",),
            vmem_limit_bytes=int(vmem_limit)),
        cost_estimate=cost,
    )(conv_w, x_flat)


# ---------------------------------------------------------------------------
# Two-pass tiled kernels (large slabs): pass 1 reduce + gate, pass 2 multiply.
# ---------------------------------------------------------------------------
def _eca_reduce_gate(x_flat, conv_w, k_size, pad, ts):
    B, C, S = x_flat.shape
    n_s = pl.cdiv(S, ts)
    ragged = (S % ts) != 0
    inv_s = 1.0 / float(S)
    itemsize = jnp.dtype(x_flat.dtype).itemsize

    def kernel(w_ref, x_ref, gate_ref, acc_ref, ypad_ref):
        s = pl.program_id(1)

        @pl.when(s == 0)
        def _():
            acc_ref[...] = jnp.zeros_like(acc_ref)

        x = x_ref[...]                                   # (C, ts) native dtype
        if ragged:
            # Mask out-of-bounds lanes of the (only) partial boundary tile.
            lane = jax.lax.broadcasted_iota(jnp.int32, (C, ts), 1)
            valid = lane < (S - s * ts)
            x = jnp.where(valid, x, jnp.zeros((), x.dtype))
        # f32 accumulation of the spatial sum; x tile stays in its native dtype.
        acc_ref[...] += jnp.sum(x, axis=-1, keepdims=True, dtype=jnp.float32)

        @pl.when(s == pl.num_programs(1) - 1)
        def _():
            gate_ref[...] = _conv_gate(w_ref, acc_ref[...], ypad_ref,
                                       C, k_size, pad, inv_s)

    cost = pl.CostEstimate(
        flops=int(B * C * S + 2 * B * C * k_size),
        transcendentals=int(B * C),
        bytes_accessed=int(B * C * S * itemsize + B * C * 4),
    )
    return pl.pallas_call(
        kernel,
        out_shape=jax.ShapeDtypeStruct((B, C, 1), jnp.float32),
        grid_spec=pltpu.PrefetchScalarGridSpec(
            num_scalar_prefetch=0,
            grid=(B, n_s),
            in_specs=[
                pl.BlockSpec(memory_space=pltpu.MemorySpace.SMEM),        # conv taps (k,)
                pl.BlockSpec((None, C, ts), lambda b, s: (b, 0, s)),
            ],
            out_specs=pl.BlockSpec((None, C, 1), lambda b, s: (b, 0, 0)),
            scratch_shapes=[
                pltpu.VMEM((C, 1), jnp.float32),             # per-channel sum accumulator
                pltpu.VMEM((C + 2 * pad, 1), jnp.float32),   # zero-padded conv buffer
            ],
        ),
        compiler_params=pltpu.CompilerParams(
            dimension_semantics=("parallel", "arbitrary")),
        cost_estimate=cost,
    )(conv_w, x_flat)


def _eca_apply_gate(x_flat, gate, ts):
    B, C, S = x_flat.shape
    n_s = pl.cdiv(S, ts)
    itemsize = jnp.dtype(x_flat.dtype).itemsize

    def kernel(x_ref, g_ref, o_ref):
        # Boundary tiles: garbage lanes are computed but dropped by the masked store.
        o_ref[...] = x_ref[...] * g_ref[...].astype(o_ref.dtype)

    cost = pl.CostEstimate(
        flops=int(B * C * S),
        transcendentals=0,
        bytes_accessed=int(2 * B * C * S * itemsize + B * C * 4),
    )
    return pl.pallas_call(
        kernel,
        out_shape=jax.ShapeDtypeStruct((B, C, S), x_flat.dtype),
        grid_spec=pltpu.PrefetchScalarGridSpec(
            num_scalar_prefetch=0,
            grid=(B, n_s),
            in_specs=[
                pl.BlockSpec((None, C, ts), lambda b, s: (b, 0, s)),
                pl.BlockSpec((None, C, 1), lambda b, s: (b, 0, 0)),   # gate fetched once per b
            ],
            out_specs=pl.BlockSpec((None, C, ts), lambda b, s: (b, 0, s)),
        ),
        compiler_params=pltpu.CompilerParams(
            dimension_semantics=("parallel", "parallel")),
        cost_estimate=cost,
    )(x_flat, gate)


def _pick_spatial_tile(S, C, itemsize, block_budget_bytes=2 * 1024 * 1024):
    """Pick the spatial tile for the two-pass path.

    Small S -> full extent (single block, always legal).  Otherwise the largest
    multiple-of-128 tile whose (C, TS) block fits the budget, preferring an exact
    divisor of S (no masking); ragged tails are handled in-kernel if unavoidable.
    """
    max_ts = max(128, (block_budget_bytes // max(1, C * itemsize)) // 128 * 128)
    if S <= max_ts:
        return S
    if S % 128 == 0:
        for ts in range(min(S, max_ts), 127, -128):
            if S % ts == 0:
                return ts
    return max_ts


# ---------------------------------------------------------------------------
# Public wrapper with per-generation dispatch.
# ---------------------------------------------------------------------------
def eca_layer_chan(x, conv_w, k_size=3, force_two_pass=False, spatial_tile=None):
    """ECALayer(attend_dim='chan') forward.  x: (B, C, T, F); conv_w: (k_size,)."""
    B, C, T, F = x.shape
    S = T * F
    assert k_size % 2 == 1, "ECALayer uses an odd, same-padded Conv1d kernel"
    pad = (k_size - 1) // 2
    itemsize = jnp.dtype(x.dtype).itemsize

    x_flat = x.reshape(B, C, S)                      # S = T*F on the lane axis
    w = conv_w.astype(jnp.float32).reshape(k_size)

    # One-pass keeps a double-buffered (C, S) input + output slab resident (~4 slabs).
    # 2x HBM traffic vs 3x for two-pass, so use it whenever it comfortably fits VMEM.
    try:
        vmem_cap = int(pltpu.get_tpu_info().vmem_capacity_bytes)
    except Exception:
        vmem_cap = 64 * 1024 * 1024                  # conservative (v7x per-TC)
    slab_bytes = C * S * itemsize
    needed_vmem = 4 * slab_bytes + (2 << 20)         # dbl-buffered in+out + headroom
    one_pass_budget = min(vmem_cap // 2, 64 << 20)
    one_pass = (not force_two_pass) and (needed_vmem <= one_pass_budget)

    if one_pass:
        out_flat = _eca_one_pass(x_flat, w, k_size, pad,
                                 vmem_limit=max(needed_vmem, 16 << 20))
    else:
        ts = spatial_tile if spatial_tile is not None else _pick_spatial_tile(S, C, itemsize)
        assert 0 < ts <= S, "spatial tile must be in (0, T*F]"
        gate = _eca_reduce_gate(x_flat, w, k_size, pad, ts)      # (B, C, 1) f32
        out_flat = _eca_apply_gate(x_flat, gate, ts)
    return out_flat.reshape(B, C, T, F)


def eca_layer_chan_ref(x, conv_w, k_size=3):
    """Pure-JAX reference mirroring the PyTorch forward."""
    b, c, t, f = x.shape
    pad = (k_size - 1) // 2
    y = x.astype(jnp.float32).mean(axis=(2, 3))                  # (b, c)
    yp = jnp.pad(y, ((0, 0), (pad, pad)))
    yc = sum(conv_w[m] * yp[:, m:m + c] for m in range(k_size))
    gate = jax.nn.sigmoid(yc)
    return x * gate[:, :, None, None].astype(x.dtype)


if __name__ == "__main__":
    key = jax.random.PRNGKey(0)
    kx, kw, kx2, kx3 = jax.random.split(key, 4)

    B, C, T, F = 2, 4, 16, 16
    k_size = 3
    x = jax.random.normal(kx, (B, C, T, F), dtype=jnp.float32)

    # Conv1d(1, 1, 3, bias=False) init: uniform(+-1/sqrt(fan_in)), fan_in = 3.
    bound = 1.0 / np.sqrt(1 * k_size)
    conv_w = jax.random.uniform(kw, (k_size,), dtype=jnp.float32,
                                minval=-bound, maxval=bound)

    ref = eca_layer_chan_ref(x, conv_w, k_size=k_size)

    # 1) Auto dispatch (small slab -> fused one-pass kernel).
    out = jax.block_until_ready(eca_layer_chan(x, conv_w, k_size=k_size))
    np.testing.assert_allclose(np.asarray(out), np.asarray(ref), rtol=1e-5, atol=1e-5)

    # 2) Forced two-pass tiled path with multiple spatial tiles (S=256, TS=128).
    out2 = jax.block_until_ready(
        eca_layer_chan(x, conv_w, k_size=k_size, force_two_pass=True, spatial_tile=128))
    np.testing.assert_allclose(np.asarray(out2), np.asarray(ref), rtol=1e-5, atol=1e-5)

    # 3) Ragged spatial extent (S=200, TS=128 -> masked boundary tile in both passes).
    x3 = jax.random.normal(kx3, (2, 8, 10, 20), dtype=jnp.float32)
    ref3 = eca_layer_chan_ref(x3, conv_w, k_size=k_size)
    out3 = jax.block_until_ready(
        eca_layer_chan(x3, conv_w, k_size=k_size, force_two_pass=True, spatial_tile=128))
    np.testing.assert_allclose(np.asarray(out3), np.asarray(ref3), rtol=1e-5, atol=1e-5)

    # 4) Small spatial size not a multiple of 128 (full-extent single tile).
    x4 = jax.random.normal(kx2, (1, 8, 5, 6), dtype=jnp.float32)
    ref4 = eca_layer_chan_ref(x4, conv_w, k_size=k_size)
    out4 = jax.block_until_ready(
        eca_layer_chan(x4, conv_w, k_size=k_size, force_two_pass=True))
    np.testing.assert_allclose(np.asarray(out4), np.asarray(ref4), rtol=1e-5, atol=1e-5)

    print("KERNEL_OK")
</pallas_src>

<mosaic_0001>
module attributes {stable_mosaic.version = 11 : i64} {
  func.func @kernel(%arg0: i32, %arg1: memref<3xf32, #tpu.memory_space<smem>>, %arg2: memref<1x4x256xf32, #tpu.memory_space<vmem>>, %arg3: memref<1x4x256xf32, #tpu.memory_space<vmem>>, %arg4: memref<6x1xf32, #tpu.memory_space<vmem>>) attributes {dimension_semantics = [#tpu.dimension_semantics<parallel>], iteration_bounds = array<i64: 2>, scalar_prefetch = 0 : i64, scratch_operands = 1 : i64, tpu.core_type = #tpu.core_type<tc>, window_params = [{transform_indices = @transform_0, window_bounds = array<i64: 3>}, {transform_indices = @transform_1, window_bounds = array<i64: 1, 4, 256>}, {transform_indices = @transform_2, window_bounds = array<i64: 1, 4, 256>}]} {
    %c0 = arith.constant 0 : index
    %c0_0 = arith.constant 0 : index
    %c0_1 = arith.constant 0 : index
    %0 = vector.load %arg2[%c0, %c0_0, %c0_1] : memref<1x4x256xf32, #tpu.memory_space<vmem>>, vector<1x4x256xf32>
    %1 = vector.shape_cast %0 : vector<1x4x256xf32> to vector<4x256xf32>
    %cst = arith.constant dense<0.000000e+00> : vector<4xf32>
    %2 = vector.multi_reduction <add>, %1, %cst [1] : vector<4x256xf32> to vector<4xf32>
    %3 = vector.shape_cast %2 : vector<4xf32> to vector<4x1xf32>
    %cst_2 = arith.constant 0.000000e+00 : f32
    %4 = vector.broadcast %cst_2 : f32 to vector<6x1xf32>
    %c0_3 = arith.constant 0 : index
    %c0_4 = arith.constant 0 : index
    %5 = vector.load %arg4[%c0_3, %c0_4] : memref<6x1xf32, #tpu.memory_space<vmem>>, vector<6x1xf32>
    tpu.vector_store %arg4[%c0_3, %c0_4], %4 {strides = array<i32>} : memref<6x1xf32, #tpu.memory_space<vmem>>, vector<6x1xf32>,
    %c1 = arith.constant 1 : index
    %c0_5 = arith.constant 0 : index
    %6 = vector.load %arg4[%c1, %c0_5] : memref<6x1xf32, #tpu.memory_space<vmem>>, vector<4x1xf32>
    tpu.vector_store %arg4[%c1, %c0_5], %3 {strides = array<i32>} : memref<6x1xf32, #tpu.memory_space<vmem>>, vector<4x1xf32>,
    %cst_6 = arith.constant 0.000000e+00 : f32
    %7 = vector.broadcast %cst_6 : f32 to vector<4x1xf32>
    %c0_7 = arith.constant 0 : index
    %8 = memref.load %arg1[%c0_7] : memref<3xf32, #tpu.memory_space<smem>>
    %c0_8 = arith.constant 0 : index
    %c0_9 = arith.constant 0 : index
    %9 = vector.load %arg4[%c0_8, %c0_9] : memref<6x1xf32, #tpu.memory_space<vmem>>, vector<4x1xf32>
    %10 = vector.broadcast %8 : f32 to vector<4x1xf32>
    %11 = arith.mulf %10, %9 : vector<4x1xf32>
    %12 = arith.addf %7, %11 : vector<4x1xf32>
    %c1_10 = arith.constant 1 : index
    %13 = memref.load %arg1[%c1_10] : memref<3xf32, #tpu.memory_space<smem>>
    %c1_11 = arith.constant 1 : index
    %c0_12 = arith.constant 0 : index
    %14 = vector.load %arg4[%c1_11, %c0_12] : memref<6x1xf32, #tpu.memory_space<vmem>>, vector<4x1xf32>
    %15 = vector.broadcast %13 : f32 to vector<4x1xf32>
    %16 = arith.mulf %15, %14 : vector<4x1xf32>
    %17 = arith.addf %12, %16 : vector<4x1xf32>
    %c2 = arith.constant 2 : index
    %18 = memref.load %arg1[%c2] : memref<3xf32, #tpu.memory_space<smem>>
    %c2_13 = arith.constant 2 : index
    %c0_14 = arith.constant 0 : index
    %19 = vector.load %arg4[%c2_13, %c0_14] : memref<6x1xf32, #tpu.memory_space<vmem>>, vector<4x1xf32>
    %20 = vector.broadcast %18 : f32 to vector<4x1xf32>
    %21 = arith.mulf %20, %19 : vector<4x1xf32>
    %22 = arith.addf %17, %21 : vector<4x1xf32>
    %cst_15 = arith.constant 3.906250e-03 : f32
    %23 = vector.broadcast %cst_15 : f32 to vector<4x1xf32>
    %24 = arith.mulf %22, %23 : vector<4x1xf32>
    %25 = arith.negf %24 : vector<4x1xf32>
    %26 = math.exp %25 : vector<4x1xf32>
    %cst_16 = arith.constant 1.000000e+00 : f32
    %27 = vector.broadcast %cst_16 : f32 to vector<4x1xf32>
    %28 = arith.addf %27, %26 : vector<4x1xf32>
    %29 = arith.divf %27, %28 : vector<4x1xf32>
    %30 = vector.broadcast %29 : vector<4x1xf32> to vector<4x256xf32>
    %31 = arith.mulf %1, %30 : vector<4x256xf32>
    %c0_17 = arith.constant 0 : index
    %c0_18 = arith.constant 0 : index
    %c0_19 = arith.constant 0 : index
    %32 = vector.load %arg3[%c0_17, %c0_18, %c0_19] : memref<1x4x256xf32, #tpu.memory_space<vmem>>, vector<1x4x256xf32>
    %33 = vector.shape_cast %32 : vector<1x4x256xf32> to vector<4x256xf32>
    %34 = vector.shape_cast %31 : vector<4x256xf32> to vector<1x4x256xf32>
    tpu.vector_store %arg3[%c0_17, %c0_18, %c0_19], %34 {strides = array<i32>} : memref<1x4x256xf32, #tpu.memory_space<vmem>>, vector<1x4x256xf32>,
    return
  }
  func.func @transform_0(%arg0: i32) -> i32 {
    %c0_i32 = arith.constant 0 : i32
    %c0_i32_0 = arith.constant 0 : i32
    return %c0_i32 : i32
  }
  func.func @transform_1(%arg0: i32) -> (i32, i32, i32) {
    %c0_i32 = arith.constant 0 : i32
    %c0_i32_0 = arith.constant 0 : i32
    %c0_i32_1 = arith.constant 0 : i32
    return %arg0, %c0_i32, %c0_i32_0 : i32, i32, i32
  }
  func.func @transform_2(%arg0: i32) -> (i32, i32, i32) {
    %c0_i32 = arith.constant 0 : i32
    %c0_i32_0 = arith.constant 0 : i32
    %c0_i32_1 = arith.constant 0 : i32
    return %arg0, %c0_i32, %c0_i32_0 : i32, i32, i32
  }
}

</mosaic_0001>

<llo_original>
// kernel: tpu_custom_call.1
$region0: #{tpu_custom_call.1}
  #allocation0 [shape = 'u32[]', space=smem, size = 0x4, offset = 0x4, fixed_abs, tag = 'smem constant byte address 0x4 - core index']
  #allocation1 [shape = 'u32[144,128]{1,0:T(1,128)}', space=vmem, size = 0x12000, scoped, tag = 'internal scratch']
  #allocation2 [shape = 'f32[6,1]{1,0:T(8,128)}', space=vmem, size = 0x1000, scoped, tag = 'scratch operand']
  %s0 = inlined_call_operand.hbm [shape: f32[3], index: 0, kind: input, shape index: {}]
  %s1 = inlined_call_operand.hbm [shape: f32[2,4,256], index: 1, kind: input, shape index: {}]
  %s2 = inlined_call_operand.hbm [shape: f32[2,4,256], index: 2, kind: output, shape index: {}]
  %s3 = sld [smem:[#allocation0]]
  $region49: #{tpu_custom_call.1} parent=0
    _
  %s5 = ssub.s32 1, %s3
  %s6 = scalar_select 0, %s5, %s3
  $region1: #{tpu_custom_call.1} parent=0
    #allocation3 [shape = 'u8[512]{0}', space=smem, size = 0x200, scoped, tag = 'input window, operand 0, single buffered']
    #allocation4 [shape = 's32[2]{0}', space=sflag, size = 0x8, scoped, tag = 'scoped memory for tpu_custom_call.1']
    #allocation5 [shape = 's32[2]{0}', space=sflag, size = 0x8, scoped, tag = 'scoped memory for tpu_custom_call.1']
    #allocation6 [shape = 's32[2]{0}', space=sflag, size = 0x8, scoped, tag = 'scoped memory for tpu_custom_call.1']
    #allocation7 [shape = 'u8[8192]{0}', space=vmem, size = 0x2000, scoped, tag = 'input window, operand 1']
    #allocation8 [shape = 'u8[8192]{0}', space=vmem, size = 0x2000, scoped, tag = 'output window, operand 0']
    %7 = vsyncpa [#allocation6], 0
    %8 = vsyncpa [#allocation4], 0
    %s9 = scalar_lea.sflag [#allocation4], 1
    %10 = vsyncpa %s9, 0
    %11 = vsyncpa [#allocation5], 0
    %s12 = scalar_lea.sflag [#allocation5], 1
    %13 = vsyncpa %s12, 0
    loop: start=0, step=1, limit=4
    $region2: #{tpu_custom_call.1} parent=1 // loop_pre_header
      _
    $region3: #{tpu_custom_call.1} parent=1 // loop_header
      %s15 = sphi 0, %s19
      %p16 = scmp.ge.s32.totalorder %s15, 4
      %s23 = sphi 0, %s23
      %s25 = sphi 0, %s23
      %s26 = sphi 0, %s25
      %s40 = sphi 0, %s26
      %s46 = sphi 0, %s48
      %s49 = sphi 0, %s46
      %s50 = sphi 0, %s49
      %s66 = sphi 0, %s50
      %s72 = sphi 0, %s74
      %s75 = sphi 0, %s72
      %s76 = sphi 0, %s75
      %s92 = sphi 0, %s76
    $region4: #{tpu_custom_call.1} parent=1 // loop_header_branch
      %18 = sbr.rel (%p16) target = $region8
    $region5: #{tpu_custom_call.1} parent=1 // loop_body
      %s20 = ssub.s32 %s15, 1
      %s21 = ssub.s32 %s15, 2
      %s22 = sadd.s32 %s15, 1
      %s24 = sadd.s32 %s23, 1
      %p27 = scmp.eq.s32.totalorder %s15, 1
      %p28 = scmp.ne.s32.totalorder %s23, %s25
      %p29 = scmp.eq.s32.totalorder %s15, 0
      %p30 = por %p28, %p29
      %p31 = scmp.ne.s32.totalorder %s23, %s25
      %p32 = scmp.eq.s32.totalorder %s20, 1
      %p33 = por %p31, %p32
      %p34 = scmp.ne.s32.totalorder %s25, %s26
      %p35 = scmp.eq.s32.totalorder %s20, 0
      %p36 = por %p34, %p35
      %p37 = scmp.ne.s32.totalorder %s25, %s26
      %p38 = scmp.eq.s32.totalorder %s21, 1
      %p39 = por %p37, %p38
      %p41 = scmp.ne.s32.totalorder %s26, %s40
      %p42 = scmp.eq.s32.totalorder %s21, 0
      %p43 = por %p41, %p42
      %s44 = ssub.s32 %s15, %s22
      %p45 = scmp.eq.s32.totalorder %s44, 0
      %s47 = sadd.s32 %s46, 1
      %s48 = scalar_select %p45, %s46, %s47
      %p51 = pneg %p45
      %p52 = scmp.eq.s32.totalorder %s15, 1
      %p53 = por %p51, %p52
      %p54 = scmp.ne.s32.totalorder %s46, %s49
      %p55 = scmp.eq.s32.totalorder %s15, 0
      %p56 = por %p54, %p55
      %p57 = scmp.ne.s32.totalorder %s46, %s49
      %p58 = scmp.eq.s32.totalorder %s20, 1
      %p59 = por %p57, %p58
      %p60 = scmp.ne.s32.totalorder %s49, %s50
      %p61 = scmp.eq.s32.totalorder %s20, 0
      %p62 = por %p60, %p61
      %p63 = scmp.ne.s32.totalorder %s49, %s50
      %p64 = scmp.eq.s32.totalorder %s21, 1
      %p65 = por %p63, %p64
      %p67 = scmp.ne.s32.totalorder %s50, %s66
      %p68 = scmp.eq.s32.totalorder %s21, 0
      %p69 = por %p67, %p68
      %s70 = ssub.s32 %s15, %s22
      %p71 = scmp.eq.s32.totalorder %s70, 0
      %s73 = sadd.s32 %s72, 1
      %s74 = scalar_select %p71, %s72, %s73
      %p77 = pneg %p71
      %p78 = scmp.eq.s32.totalorder %s15, 1
      %p79 = por %p77, %p78
      %p80 = scmp.ne.s32.totalorder %s72, %s75
      %p81 = scmp.eq.s32.totalorder %s15, 0
      %p82 = por %p80, %p81
      %p83 = scmp.ne.s32.totalorder %s72, %s75
      %p84 = scmp.eq.s32.totalorder %s20, 1
      %p85 = por %p83, %p84
      %p86 = scmp.ne.s32.totalorder %s75, %s76
      %p87 = scmp.eq.s32.totalorder %s20, 0
      %p88 = por %p86, %p87
      %p89 = scmp.ne.s32.totalorder %s75, %s76
      %p90 = scmp.eq.s32.totalorder %s21, 1
      %p91 = por %p89, %p90
      %p93 = scmp.ne.s32.totalorder %s76, %s92
      %p94 = scmp.eq.s32.totalorder %s21, 0
      %p95 = por %p93, %p94
      %p96 = scmp.le.s32.totalorder 1, %s15
      %p97 = scmp.lt.s32.totalorder %s15, 3
      %p98 = pnand %p96, %p97
      %p99 = pneg %p98
      // Predicated region
      $region9: #{tpu_custom_call.1} parent=5 // pred_check
        _
      $region10: #{tpu_custom_call.1} parent=5 // pred_check_branch
        %101 = sbr.rel (%p98) target = $region12
      $region11: #{tpu_custom_call.1} parent=5 // pred_region
        %s102 = ssub.s32 %s15, 1
        // Predicated region
        $region13: #{tpu_custom_call.1} parent=11 // pred_check
          %p103 = pneg %p36
        $region14: #{tpu_custom_call.1} parent=11 // pred_check_branch
          %105 = sbr.rel (%p103) target = $region16
        $region15: #{tpu_custom_call.1} parent=11 // pred_region
          %s107 = ssub.s32 16, 16
          %108 = vsyncadd [#allocation6], %s107
          %111 = dma.hbm_to_smem %s0, 16, [#allocation3], [#allocation6]
        $region16: #{tpu_custom_call.1} parent=11 // pred_fallthru
          _
      $region12: #{tpu_custom_call.1} parent=5 // pred_fallthru
        _
      %p112 = scmp.lt.s32.totalorder %s15, 2
      // Predicated region
      $region17: #{tpu_custom_call.1} parent=5 // pred_check
        %p113 = pneg %p112
      $region18: #{tpu_custom_call.1} parent=5 // pred_check_branch
        %115 = sbr.rel (%p113) target = $region20
      $region19: #{tpu_custom_call.1} parent=5 // pred_region
        // Predicated region
        $region21: #{tpu_custom_call.1} parent=19 // pred_check
          %p116 = pneg %p56
        $region22: #{tpu_custom_call.1} parent=19 // pred_check_branch
          %118 = sbr.rel (%p116) target = $region24
        $region23: #{tpu_custom_call.1} parent=19 // pred_region
          %s119 = sand.u32 %s46, 1
          %s120 = scalar_lea.sflag [#allocation4], %s119
          %s121 = sand.u32 %s46, 1
          %s122 = smul.addr %s121, 8
          %s123 = scalar_lea.vmem [#allocation7], %s122
          %s125 = ssub.s32 128, 128
          %126 = vsyncadd %s120, %s125
          %s127 = smul.addr %s15, 2
          %s128 = smul.addr %s127, 64
          %s129 = scalar_lea.hbm %s1, %s128
          %s131 = sshll.u32 %s123, 4
          %s132 = int_to_ptr.vmem [resolvable:$true] %s131
          %134 = dma.hbm_to_vmem [thread:$0]  %s129, 128, %s132, %s120
        $region24: #{tpu_custom_call.1} parent=19 // pred_fallthru
          _
      $region20: #{tpu_custom_call.1} parent=5 // pred_fallthru
        _
      %p135 = scmp.le.s32.totalorder 1, %s15
      %p136 = scmp.lt.s32.totalorder %s15, 3
      %p137 = pnand %p135, %p136
      %p138 = pneg %p137
      // Predicated region
      $region25: #{tpu_custom_call.1} parent=5 // pred_check
        _
      $region26: #{tpu_custom_call.1} parent=5 // pred_check_branch
        %140 = sbr.rel (%p137) target = $region28
      $region27: #{tpu_custom_call.1} parent=5 // pred_region
        %s141 = ssub.s32 %s15, 1
        // Predicated region
        $region29: #{tpu_custom_call.1} parent=27 // pred_check
          %p142 = pneg %p36
        $region30: #{tpu_custom_call.1} parent=27 // pred_check_branch
          %144 = sbr.rel (%p142) target = $region32
        $region31: #{tpu_custom_call.1} parent=27 // pred_region
          %145 = dma.done [#allocation6], 16
        $region32: #{tpu_custom_call.1} parent=27 // pred_fallthru
          _
        %s146 = sand.u32 %s49, 1
        %s147 = scalar_lea.sflag [#allocation4], %s146
        %s148 = sand.u32 %s49, 1
        %s149 = smul.addr %s148, 8
        %s150 = scalar_lea.vmem [#allocation7], %s149
        // Predicated region
        $region33: #{tpu_custom_call.1} parent=27 // pred_check
          %p151 = pneg %p62
        $region34: #{tpu_custom_call.1} parent=27 // pred_check_branch
          %153 = sbr.rel (%p151) target = $region36
        $region35: #{tpu_custom_call.1} parent=27 // pred_region
          %154 = dma.done %s147, 128
        $region36: #{tpu_custom_call.1} parent=27 // pred_fallthru
          _
        %155 = sfence
        %p156 = pneg %p36
        %p157 = pneg %p33
        %s158 = sand.u32 %s49, 1
        %s159 = scalar_lea.sflag [#allocation4], %s158
        %s160 = sand.u32 %s49, 1
        %s161 = smul.addr %s160, 8
        %s162 = scalar_lea.vmem [#allocation7], %s161
        %p163 = pneg %p62
        %p164 = pneg %p59
        %p165 = pneg %p88
        %p166 = pneg %p85
        %s167 = sand.u32 %s75, 1
        %s168 = scalar_lea.sflag [#allocation5], %s167
        %s169 = sand.u32 %s75, 1
        %s170 = smul.addr %s169, 8
        %s171 = scalar_lea.vmem [#allocation8], %s170
        %v172 = vld [vmem:[%s150] sm:$0xff]
        %v174 = vcombine.high %v172, %v172
        %vm176 = vcmask 1043456
        %v177 = vsel %vm176, %v172, 0.0
        %v178 = vsel %vm176, %v174, 0.0
        %v179 = vadd.f32 %v177, %v178
        %180 = vadd.xlane.f32.xlu0 %v179
        %v181 = vpop.xlane.xlu0 %180
        %vm182 = vcmask 5120
        %183 = vst.msk [vmem:[#allocation2] sm:$0x3f] %vm182, 0.0
        %vm184 = vcmask 3072
        %185 = vst.msk [vmem:[#allocation2 + $0x1] sm:$0xf] %vm184, %v181
        %s186 = sld [smem:[#allocation3]]
        %v187 = vld [vmem:[#allocation2] sm:$0xf]
        %v188 = vstv %s186
        %v189 = vmul.f32 %v188, %v187
        %v190 = vadd.f32 %v189, 0.0
        %s191 = sld [smem:[#allocation3 + $0x1]]
        %v192 = vld [vmem:[#allocation2 + $0x1] sm:$0xf]
        %v193 = vstv %s191
        %v194 = vmul.f32 %v193, %v192
        %v195 = vadd.f32 %v190, %v194
        %s196 = sld [smem:[#allocation3 + $0x2]]
        %v197 = vld [vmem:[#allocation2 + $0x2] sm:$0xf]
        %v198 = vstv %s196
        %v199 = vmul.f32 %v198, %v197
        %v200 = vadd.f32 %v195, %v199
        %v201 = vmul.f32 %v200, 0.00390625
        %v202 = vxor.u32 %v201, 2147483648
        %v203 = vmul.f32 %v202, 1.442695
        %v204 = vpow.pop %v203
        %v205 = vadd.f32 %v204, 1.0
        %v206 = vrcp.pop %v205
        %v207 = vmul.f32 1.0, %v206
        %209 = vset.pattern.permute.xlu0 0
        %210 = vperm.xlu0 %209, %v207
        %v211 = vpop.permute.xlu0 %210
        %v213 = vunpack.c.l.s4 839922192
        %v214 = vunpack.c.0.s8 %v213
        %v215 = vlaneseq
        %v216 = vshrl.u32 %v215, 7
        %v217 = vsub.s32 %v214, %v216
        %v218 = vrot.slane %v211, %v217
        %v220 = vmul.f32 %v172, %v218
        %221 = vst [vmem:[%s171] sm:$0xff] %v220
        %s222 = sand.u32 %s75, 1
        %s223 = scalar_lea.sflag [#allocation5], %s222
        %s224 = sand.u32 %s75, 1
        %s225 = smul.addr %s224, 8
        %s226 = scalar_lea.vmem [#allocation8], %s225
        // Predicated region
        $region37: #{tpu_custom_call.1} parent=27 // pred_check
          %p227 = pneg %p85
        $region38: #{tpu_custom_call.1} parent=27 // pred_check_branch
          %229 = sbr.rel (%p227) target = $region40
        $region39: #{tpu_custom_call.1} parent=27 // pred_region
          %s231 = ssub.s32 128, 128
          %232 = vsyncadd %s223, %s231
          %s233 = smul.addr %s20, 2
          %s234 = smul.addr %s233, 64
          %s235 = scalar_lea.hbm %s2, %s234
          %s237 = sshll.u32 %s226, 4
          %s238 = int_to_ptr.vmem [resolvable:$true] %s237
          %240 = dma.vmem_to_hbm [thread:$0]  %s238, 128, %s235, %s223
        $region40: #{tpu_custom_call.1} parent=27 // pred_fallthru
          _
      $region28: #{tpu_custom_call.1} parent=5 // pred_fallthru
        _
      %p241 = scmp.le.s32.totalorder 2, %s15
      // Predicated region
      $region41: #{tpu_custom_call.1} parent=5 // pred_check
        %p242 = pneg %p241
      $region42: #{tpu_custom_call.1} parent=5 // pred_check_branch
        %244 = sbr.rel (%p242) target = $region44
      $region43: #{tpu_custom_call.1} parent=5 // pred_region
        %s245 = ssub.s32 %s15, 2
        // Predicated region
        $region45: #{tpu_custom_call.1} parent=43 // pred_check
          %p246 = pneg %p91
        $region46: #{tpu_custom_call.1} parent=43 // pred_check_branch
          %248 = sbr.rel (%p246) target = $region48
        $region47: #{tpu_custom_call.1} parent=43 // pred_region
          %s249 = sand.u32 %s76, 1
          %s250 = scalar_lea.sflag [#allocation5], %s249
          %s251 = sand.u32 %s76, 1
          %s252 = smul.addr %s251, 8
          %s253 = scalar_lea.vmem [#allocation8], %s252
          %254 = dma.done %s250, 128
        $region48: #{tpu_custom_call.1} parent=43 // pred_fallthru
          _
      $region44: #{tpu_custom_call.1} parent=5 // pred_fallthru
        _
    $region6: #{tpu_custom_call.1} parent=1 // loop_footer
      %s19 = sadd.s32 1, %s15
    $region7: #{tpu_custom_call.1} parent=1 // loop_footer_branch
      %14 = sbr.rel target = $region3
    $region8: #{tpu_custom_call.1} parent=1 // loop_exit
      _
    %255 = vsyncpa [#allocation4], 1
    %s256 = scalar_lea.sflag [#allocation4], 1
    %257 = vsyncpa %s256, 1
    %258 = vsyncpa [#allocation5], 1
    %s259 = scalar_lea.sflag [#allocation5], 1
    %260 = vsyncpa %s259, 1
    %261 = vsyncpa [#allocation6], 1
    %s262 = scalar_lea.sflag [#allocation6], 1
    %263 = vsyncpa %s262, 1

</llo_original>
